<compile_context>
chip_gen: v7x
topology: tpu7x:2x2x1
jax: 0.10.0
libtpu: 0.0.40
codegen_flags: <defaults>
</compile_context>

<pallas_src>
import math

import jax
import jax.numpy as jnp
from jax.experimental import pallas as pl
from jax.experimental.pallas import tpu as pltpu

FIXED_LENGTH = 10        # truncate_and_pad target length (model input width)
IN = FIXED_LENGTH        # 10
H1 = 512
H2 = 256
OUT = 1
OUT_PAD = 128            # lane-dense output width (slice [:, :1] in the wrapper)
TB_MAX = 2048            # max batch tile; ~7 MiB of f32 intermediates, fits all gens


def _mlp_kernel(x_ref, w1_ref, b1_ref, w2_ref, b2_ref, w3_ref, b3_ref, o_ref):
    """Fully fused predictor MLP: Linear->ReLU->Linear->ReLU->Linear->Sigmoid.

    Weights arrive in bf16 (MXU-native); accumulation, bias add, ReLU and
    sigmoid stay in f32.
    """
    x = x_ref[...].astype(jnp.bfloat16)
    h1 = jnp.dot(x, w1_ref[...], preferred_element_type=jnp.float32) + b1_ref[...]
    h1 = jnp.maximum(h1, 0.0)                                        # ReLU (f32)
    h2 = (jnp.dot(h1.astype(jnp.bfloat16), w2_ref[...],
                  preferred_element_type=jnp.float32) + b2_ref[...])
    h2 = jnp.maximum(h2, 0.0)                                        # ReLU (f32)
    logits = (jnp.dot(h2.astype(jnp.bfloat16), w3_ref[...],
                      preferred_element_type=jnp.float32) + b3_ref[...])
    o_ref[...] = jax.nn.sigmoid(logits).astype(o_ref.dtype)          # Sigmoid


def _batch_tiling(b):
    """Pick (batch_tile, padded_batch).

    Always a multiple of 8 (sublane), as large as possible (cap TB_MAX) so the
    number of grid steps stays tiny; for b > 256 keep >= 2 grid steps so the
    'parallel' axis can shard across v7x's two TensorCores.
    """
    padded = ((b + 7) // 8) * 8
    if padded <= 256:
        return padded, padded                      # single big step
    # roughly half the padded batch, rounded to a multiple of 8, capped
    tb = min(TB_MAX, ((padded + 15) // 16) * 8)
    padded = ((b + tb - 1) // tb) * tb
    return tb, padded


@jax.jit
def word_confidence_linear_head(confidence, params):
    """confidence: (B, 10) float32 — truncated/padded per-word ASR confidences."""
    b = confidence.shape[0]
    w1, b1, w2, b2, w3, b3 = params
    tb, padded_b = _batch_tiling(b)
    grid = (padded_b // tb,)

    # Pad batch to the tile multiple (extra rows are garbage; sliced off below).
    x = confidence
    if padded_b != b:
        x = jnp.pad(x, ((0, padded_b - b), (0, 0)))

    # bf16 weights (halves resident DMA/VMEM); f32 biases.
    w1b = w1.astype(jnp.bfloat16)
    w2b = w2.astype(jnp.bfloat16)
    # Lane-dense third layer: zero-pad W3/b3 from OUT=1 to OUT_PAD=128 columns.
    w3p = jnp.zeros((H2, OUT_PAD), jnp.bfloat16).at[:, :OUT].set(
        w3.astype(jnp.bfloat16))
    b3p = jnp.zeros((1, OUT_PAD), jnp.float32).at[:, :OUT].set(b3)

    flops = 2 * padded_b * (IN * H1 + H1 * H2 + H2 * OUT_PAD)
    bytes_accessed = (4 * (padded_b * IN + H1 + H2 + OUT_PAD
                           + padded_b * OUT_PAD)
                      + 2 * (IN * H1 + H1 * H2 + H2 * OUT_PAD))

    out = pl.pallas_call(
        _mlp_kernel,
        out_shape=jax.ShapeDtypeStruct((padded_b, OUT_PAD), jnp.float32),
        grid_spec=pltpu.PrefetchScalarGridSpec(
            num_scalar_prefetch=0,
            grid=grid,
            in_specs=[
                pl.BlockSpec((tb, IN), lambda i: (i, 0)),        # x tile
                pl.BlockSpec((IN, H1), lambda i: (0, 0)),        # W1 (resident, bf16)
                pl.BlockSpec((1, H1), lambda i: (0, 0)),         # b1 (f32)
                pl.BlockSpec((H1, H2), lambda i: (0, 0)),        # W2 (resident, bf16)
                pl.BlockSpec((1, H2), lambda i: (0, 0)),         # b2 (f32)
                pl.BlockSpec((H2, OUT_PAD), lambda i: (0, 0)),   # W3 padded (bf16)
                pl.BlockSpec((1, OUT_PAD), lambda i: (0, 0)),    # b3 padded (f32)
            ],
            out_specs=pl.BlockSpec((tb, OUT_PAD), lambda i: (i, 0)),  # lane-dense
        ),
        compiler_params=pltpu.CompilerParams(
            dimension_semantics=("parallel",),
            vmem_limit_bytes=32 * 1024 * 1024,   # v5e default is only 16 MiB
        ),
        cost_estimate=pl.CostEstimate(
            flops=flops, transcendentals=padded_b * OUT_PAD,
            bytes_accessed=bytes_accessed),
    )(x, w1b, b1, w2b, b2, w3p, b3p)

    return out[:b, :OUT]


def truncate_and_pad(x, fixed_length=FIXED_LENGTH):
    """JAX equivalent of WordConfidence.truncate_and_pad (host-side prep)."""
    x = jnp.asarray(x, jnp.float32)
    n = x.shape[0]
    if n >= fixed_length:
        return x[:fixed_length]
    return jnp.concatenate([x, jnp.zeros((fixed_length - n,), x.dtype)], axis=0)


def init_predictor_params(key):
    """Deterministic init mimicking torch.nn.Linear default U(-1/sqrt(fan_in))."""
    ks = jax.random.split(key, 6)

    def linear(kw, kb, fan_in, fan_out):
        bound = 1.0 / math.sqrt(fan_in)
        w = jax.random.uniform(kw, (fan_in, fan_out), jnp.float32, -bound, bound)
        b = jax.random.uniform(kb, (1, fan_out), jnp.float32, -bound, bound)
        return w, b

    w1, b1 = linear(ks[0], ks[1], IN, H1)
    w2, b2 = linear(ks[2], ks[3], H1, H2)
    w3, b3 = linear(ks[4], ks[5], H2, OUT)
    return (w1, b1, w2, b2, w3, b3)


def _reference(confidence, params):
    """Plain-JAX f32 reference of the predictor MLP for a sanity check."""
    w1, b1, w2, b2, w3, b3 = params
    h = jnp.maximum(confidence @ w1 + b1, 0.0)
    h = jnp.maximum(h @ w2 + b2, 0.0)
    return jax.nn.sigmoid(h @ w3 + b3)


if __name__ == "__main__":
    key = jax.random.PRNGKey(0)
    k_conf, k_params = jax.random.split(key)

    B = 2
    # Stand-in for ASR word-confidence lists (variable length, values in [0,1]),
    # run through the same truncate_and_pad(10) as the PyTorch module.
    lengths = (7, 13)
    raw = [jax.random.uniform(k, (n,), jnp.float32)
           for k, n in zip(jax.random.split(k_conf, B), lengths)]
    confidence = jnp.stack([truncate_and_pad(r) for r in raw], axis=0)  # (B, 10)

    params = init_predictor_params(k_params)

    pred = word_confidence_linear_head(confidence, params)
    jax.block_until_ready(pred)

    ref = _reference(confidence, params)
    assert pred.shape == (B, 1), pred.shape
    # bf16 MXU operands vs. f32 reference -> loosened tolerance.
    assert jnp.allclose(pred, ref, atol=2e-2, rtol=2e-2), (pred, ref)

    print("KERNEL_OK")
</pallas_src>

<mosaic_0001>
module attributes {stable_mosaic.version = 11 : i64} {
  func.func @_mlp_kernel(%arg0: i32, %arg1: memref<8x10xf32, #tpu.memory_space<vmem>>, %arg2: memref<10x512xbf16, #tpu.memory_space<vmem>>, %arg3: memref<1x512xf32, #tpu.memory_space<vmem>>, %arg4: memref<512x256xbf16, #tpu.memory_space<vmem>>, %arg5: memref<1x256xf32, #tpu.memory_space<vmem>>, %arg6: memref<256x128xbf16, #tpu.memory_space<vmem>>, %arg7: memref<1x128xf32, #tpu.memory_space<vmem>>, %arg8: memref<8x128xf32, #tpu.memory_space<vmem>>) attributes {dimension_semantics = [#tpu.dimension_semantics<parallel>], iteration_bounds = array<i64: 1>, scalar_prefetch = 0 : i64, scratch_operands = 0 : i64, tpu.core_type = #tpu.core_type<tc>, window_params = [{transform_indices = @transform_0, window_bounds = array<i64: 8, 10>}, {pipeline_mode = #tpu.pipeline_mode<synchronous>, transform_indices = @transform_1, window_bounds = array<i64: 10, 512>}, {pipeline_mode = #tpu.pipeline_mode<synchronous>, transform_indices = @transform_2, window_bounds = array<i64: 1, 512>}, {pipeline_mode = #tpu.pipeline_mode<synchronous>, transform_indices = @transform_3, window_bounds = array<i64: 512, 256>}, {pipeline_mode = #tpu.pipeline_mode<synchronous>, transform_indices = @transform_4, window_bounds = array<i64: 1, 256>}, {pipeline_mode = #tpu.pipeline_mode<synchronous>, transform_indices = @transform_5, window_bounds = array<i64: 256, 128>}, {pipeline_mode = #tpu.pipeline_mode<synchronous>, transform_indices = @transform_6, window_bounds = array<i64: 1, 128>}, {transform_indices = @transform_7, window_bounds = array<i64: 8, 128>}]} {
    %c0 = arith.constant 0 : index
    %c0_0 = arith.constant 0 : index
    %0 = vector.load %arg1[%c0, %c0_0] : memref<8x10xf32, #tpu.memory_space<vmem>>, vector<8x10xf32>
    %1 = arith.truncf %0 : vector<8x10xf32> to vector<8x10xbf16>
    %c0_1 = arith.constant 0 : index
    %c0_2 = arith.constant 0 : index
    %2 = vector.load %arg2[%c0_1, %c0_2] : memref<10x512xbf16, #tpu.memory_space<vmem>>, vector<10x512xbf16>
    %cst = arith.constant dense<0.000000e+00> : vector<8x512xf32>
    %3 = tpu.matmul %1, %2, %cst {dimension_numbers = #tpu.dot_dimension_numbers<[1], [0], [0], [1], [0, 0, 1, 1], [], []>} : vector<8x10xbf16>, vector<10x512xbf16>, vector<8x512xf32> -> vector<8x512xf32>
    %c0_3 = arith.constant 0 : index
    %c0_4 = arith.constant 0 : index
    %4 = vector.load %arg3[%c0_3, %c0_4] : memref<1x512xf32, #tpu.memory_space<vmem>>, vector<1x512xf32>
    %5 = vector.broadcast %4 : vector<1x512xf32> to vector<8x512xf32>
    %6 = arith.addf %3, %5 : vector<8x512xf32>
    %cst_5 = arith.constant 0.000000e+00 : f32
    %7 = vector.broadcast %cst_5 : f32 to vector<8x512xf32>
    %8 = arith.maximumf %6, %7 : vector<8x512xf32>
    %9 = arith.truncf %8 : vector<8x512xf32> to vector<8x512xbf16>
    %c0_6 = arith.constant 0 : index
    %c0_7 = arith.constant 0 : index
    %10 = vector.load %arg4[%c0_6, %c0_7] : memref<512x256xbf16, #tpu.memory_space<vmem>>, vector<512x256xbf16>
    %cst_8 = arith.constant dense<0.000000e+00> : vector<8x256xf32>
    %11 = tpu.matmul %9, %10, %cst_8 {dimension_numbers = #tpu.dot_dimension_numbers<[1], [0], [0], [1], [0, 0, 1, 1], [], []>} : vector<8x512xbf16>, vector<512x256xbf16>, vector<8x256xf32> -> vector<8x256xf32>
    %c0_9 = arith.constant 0 : index
    %c0_10 = arith.constant 0 : index
    %12 = vector.load %arg5[%c0_9, %c0_10] : memref<1x256xf32, #tpu.memory_space<vmem>>, vector<1x256xf32>
    %13 = vector.broadcast %12 : vector<1x256xf32> to vector<8x256xf32>
    %14 = arith.addf %11, %13 : vector<8x256xf32>
    %cst_11 = arith.constant 0.000000e+00 : f32
    %15 = vector.broadcast %cst_11 : f32 to vector<8x256xf32>
    %16 = arith.maximumf %14, %15 : vector<8x256xf32>
    %17 = arith.truncf %16 : vector<8x256xf32> to vector<8x256xbf16>
    %c0_12 = arith.constant 0 : index
    %c0_13 = arith.constant 0 : index
    %18 = vector.load %arg6[%c0_12, %c0_13] : memref<256x128xbf16, #tpu.memory_space<vmem>>, vector<256x128xbf16>
    %cst_14 = arith.constant dense<0.000000e+00> : vector<8x128xf32>
    %19 = tpu.matmul %17, %18, %cst_14 {dimension_numbers = #tpu.dot_dimension_numbers<[1], [0], [0], [1], [0, 0, 1, 1], [], []>} : vector<8x256xbf16>, vector<256x128xbf16>, vector<8x128xf32> -> vector<8x128xf32>
    %c0_15 = arith.constant 0 : index
    %c0_16 = arith.constant 0 : index
    %20 = vector.load %arg7[%c0_15, %c0_16] : memref<1x128xf32, #tpu.memory_space<vmem>>, vector<1x128xf32>
    %21 = vector.broadcast %20 : vector<1x128xf32> to vector<8x128xf32>
    %22 = arith.addf %19, %21 : vector<8x128xf32>
    %23 = arith.negf %22 : vector<8x128xf32>
    %24 = math.exp %23 : vector<8x128xf32>
    %cst_17 = arith.constant 1.000000e+00 : f32
    %25 = vector.broadcast %cst_17 : f32 to vector<8x128xf32>
    %26 = arith.addf %25, %24 : vector<8x128xf32>
    %27 = arith.divf %25, %26 : vector<8x128xf32>
    %c0_18 = arith.constant 0 : index
    %c0_19 = arith.constant 0 : index
    %28 = vector.load %arg8[%c0_18, %c0_19] : memref<8x128xf32, #tpu.memory_space<vmem>>, vector<8x128xf32>
    tpu.vector_store %arg8[%c0_18, %c0_19], %27 {strides = array<i32>} : memref<8x128xf32, #tpu.memory_space<vmem>>, vector<8x128xf32>,
    return
  }
  func.func @transform_0(%arg0: i32) -> (i32, i32) {
    %c0_i32 = arith.constant 0 : i32
    %c0_i32_0 = arith.constant 0 : i32
    return %arg0, %c0_i32 : i32, i32
  }
  func.func @transform_1(%arg0: i32) -> (i32, i32) {
    %c0_i32 = arith.constant 0 : i32
    %c0_i32_0 = arith.constant 0 : i32
    %c0_i32_1 = arith.constant 0 : i32
    return %c0_i32, %c0_i32_0 : i32, i32
  }
  func.func @transform_2(%arg0: i32) -> (i32, i32) {
    %c0_i32 = arith.constant 0 : i32
    %c0_i32_0 = arith.constant 0 : i32
    %c0_i32_1 = arith.constant 0 : i32
    return %c0_i32, %c0_i32_0 : i32, i32
  }
  func.func @transform_3(%arg0: i32) -> (i32, i32) {
    %c0_i32 = arith.constant 0 : i32
    %c0_i32_0 = arith.constant 0 : i32
    %c0_i32_1 = arith.constant 0 : i32
    return %c0_i32, %c0_i32_0 : i32, i32
  }
  func.func @transform_4(%arg0: i32) -> (i32, i32) {
    %c0_i32 = arith.constant 0 : i32
    %c0_i32_0 = arith.constant 0 : i32
    %c0_i32_1 = arith.constant 0 : i32
    return %c0_i32, %c0_i32_0 : i32, i32
  }
  func.func @transform_5(%arg0: i32) -> (i32, i32) {
    %c0_i32 = arith.constant 0 : i32
    %c0_i32_0 = arith.constant 0 : i32
    %c0_i32_1 = arith.constant 0 : i32
    return %c0_i32, %c0_i32_0 : i32, i32
  }
  func.func @transform_6(%arg0: i32) -> (i32, i32) {
    %c0_i32 = arith.constant 0 : i32
    %c0_i32_0 = arith.constant 0 : i32
    %c0_i32_1 = arith.constant 0 : i32
    return %c0_i32, %c0_i32_0 : i32, i32
  }
  func.func @transform_7(%arg0: i32) -> (i32, i32) {
    %c0_i32 = arith.constant 0 : i32
    %c0_i32_0 = arith.constant 0 : i32
    return %arg0, %c0_i32 : i32, i32
  }
}

</mosaic_0001>

<llo_original>
// kernel: word_confidence_linear_head.1
$region0: #{word_confidence_linear_head.1}
  #allocation0 [shape = 'u32[]', space=smem, size = 0x4, offset = 0x4, fixed_abs, tag = 'smem constant byte address 0x4 - core index']
  #allocation1 [shape = 'u32[144,128]{1,0:T(1,128)}', space=vmem, size = 0x12000, scoped, tag = 'internal scratch']
  %s0 = inlined_call_operand.vmem [shape: f32[8,10], index: 0, kind: input, shape index: {}]
  %s1 = inlined_call_operand.vmem [shape: bf16[10,512], index: 1, kind: input, shape index: {}]
  %s2 = inlined_call_operand.vmem [shape: f32[1,512], index: 2, kind: input, shape index: {}]
  %s3 = inlined_call_operand.vmem [shape: bf16[512,256], index: 3, kind: input, shape index: {}]
  %s4 = inlined_call_operand.vmem [shape: f32[1,256], index: 4, kind: input, shape index: {}]
  %s5 = inlined_call_operand.vmem [shape: bf16[256,128], index: 5, kind: input, shape index: {}]
  %s6 = inlined_call_operand.vmem [shape: f32[1,128], index: 6, kind: input, shape index: {}]
  %s7 = inlined_call_operand.vmem [shape: f32[8,128], index: 7, kind: output, shape index: {}]
  %s8 = sld [smem:[#allocation0]]
  $region38: #{word_confidence_linear_head.1} parent=0
    _
  %s10 = ssub.s32 1, %s8
  %s11 = scalar_select 0, %s10, %s8
  // Predicated region
  $region2: #{word_confidence_linear_head.1} parent=0 // pred_check
    _
  $region3: #{word_confidence_linear_head.1} parent=0 // pred_check_branch
    %13 = sbr.rel (0) target = $region5
  $region4: #{word_confidence_linear_head.1} parent=0 // pred_region
    _
  $region5: #{word_confidence_linear_head.1} parent=0 // pred_fallthru
    _
  // Predicated region
  $region6: #{word_confidence_linear_head.1} parent=0 // pred_check
    _
  $region7: #{word_confidence_linear_head.1} parent=0 // pred_check_branch
    %15 = sbr.rel (0) target = $region9
  $region8: #{word_confidence_linear_head.1} parent=0 // pred_region
    _
  $region9: #{word_confidence_linear_head.1} parent=0 // pred_fallthru
    _
  // Predicated region
  $region10: #{word_confidence_linear_head.1} parent=0 // pred_check
    _
  $region11: #{word_confidence_linear_head.1} parent=0 // pred_check_branch
    %17 = sbr.rel (0) target = $region13
  $region12: #{word_confidence_linear_head.1} parent=0 // pred_region
    _
  $region13: #{word_confidence_linear_head.1} parent=0 // pred_fallthru
    _
  // Predicated region
  $region14: #{word_confidence_linear_head.1} parent=0 // pred_check
    _
  $region15: #{word_confidence_linear_head.1} parent=0 // pred_check_branch
    %19 = sbr.rel (0) target = $region17
  $region16: #{word_confidence_linear_head.1} parent=0 // pred_region
    _
  $region17: #{word_confidence_linear_head.1} parent=0 // pred_fallthru
    _
  // Predicated region
  $region18: #{word_confidence_linear_head.1} parent=0 // pred_check
    _
  $region19: #{word_confidence_linear_head.1} parent=0 // pred_check_branch
    %21 = sbr.rel (0) target = $region21
  $region20: #{word_confidence_linear_head.1} parent=0 // pred_region
    _
  $region21: #{word_confidence_linear_head.1} parent=0 // pred_fallthru
    _
  // Predicated region
  $region22: #{word_confidence_linear_head.1} parent=0 // pred_check
    _
  $region23: #{word_confidence_linear_head.1} parent=0 // pred_check_branch
    %23 = sbr.rel (0) target = $region25
  $region24: #{word_confidence_linear_head.1} parent=0 // pred_region
    _
  $region25: #{word_confidence_linear_head.1} parent=0 // pred_fallthru
    _
  // Predicated region
  $region26: #{word_confidence_linear_head.1} parent=0 // pred_check
    _
  $region27: #{word_confidence_linear_head.1} parent=0 // pred_check_branch
    %25 = sbr.rel (0) target = $region29
  $region28: #{word_confidence_linear_head.1} parent=0 // pred_region
    _
  $region29: #{word_confidence_linear_head.1} parent=0 // pred_fallthru
    _
  %v27 = vld [vmem:[%s0] sm:$0xff]
  %v28 = vpack.c.bf16 %v27, %v27
  %v29 = vld [vmem:[%s1] sm:$0xff]
  %v30 = vld [vmem:[%s1 + $0x8] sm:$0xff]
  %v31 = vld [vmem:[%s1 + $0x10] sm:$0x11]
  %v32 = vld [vmem:[%s1 + $0x18] sm:$0x11]
  %v33 = vld [vmem:[%s2] sm:$0xf]
  %v35 = vlaneseq
  %v36 = vshrl.u32 %v35, 7
  %v37 = vsub.s32 0, %v36
  %v38 = vrot.slane %v33, %v37
  %v39 = vlaneseq
  %v40 = vshrl.u32 %v39, 7
  %v41 = vsub.s32 1, %v40
  %v42 = vrot.slane %v33, %v41
  %v43 = vlaneseq
  %v44 = vshrl.u32 %v43, 7
  %v45 = vsub.s32 2, %v44
  %v46 = vrot.slane %v33, %v45
  %v47 = vlaneseq
  %v48 = vshrl.u32 %v47, 7
  %v49 = vsub.s32 3, %v48
  %v50 = vrot.slane %v33, %v49
  %v59 = vunpack.c.l.b16 %v29
  %v60 = vunpack.c.h.b16 %v29
  %v61 = vunpack.c.l.b16 %v30
  %v62 = vunpack.c.h.b16 %v30
  %v63 = vunpack.c.l.b16 %v31
  %v64 = vunpack.c.h.b16 %v31
  %v65 = vunpack.c.l.b16 %v32
  %v66 = vunpack.c.h.b16 %v32
  %v67 = vpack.c.b16 %v63, %v59
  %v68 = vpack.c.b16 %v64, %v60
  %v69 = vpack.c.b16 %v65, %v61
  %v70 = vpack.c.b16 %v66, %v62
  %vm71 = vcmask 80896
  %v73 = vsel %vm71, %v28, 0
  %vm75 = vcmask 1044480
  %v77 = vsel %vm75, %v67, 0
  %v80 = vsel %vm75, %v68, 0
  %v83 = vsel %vm75, %v69, 0
  %v86 = vsel %vm75, %v70, 0
  %88 = vmatprep.subr.bf16.mxu0 %v80
  %89 = vmatpush1.bf16.msra.mxu0 %v77
  %90 = vmatprep.subr.bf16.mxu0 0
  %91 = vmatpush1.bf16.msra.mxu0 0
  %92 = vmatprep.subr.bf16.mxu0 0
  %93 = vmatpush1.bf16.msra.mxu0 0
  %94 = vmatprep.subr.bf16.mxu0 0
  %95 = vmatpush1.bf16.msra.mxu0 0
  %96 = vmatprep.subr.bf16.mxu0 0
  %97 = vmatpush1.bf16.msra.mxu0 0
  %98 = vmatprep.subr.bf16.mxu0 0
  %99 = vmatpush1.bf16.msra.mxu0 0
  %100 = vmatprep.subr.bf16.mxu0 0
  %101 = vmatpush1.bf16.msra.mxu0 0
  %102 = vmatprep.subr.bf16.mxu0 0
  %103 = vmatpush1.bf16.msra.mxu0 0
  %104 = vmatprep.subr.bf16.mxu0 0
  %105 = vmatpush1.bf16.msra.mxu0 0
  %106 = vmatprep.subr.bf16.mxu0 0
  %107 = vmatpush1.bf16.msra.mxu0 0
  %108 = vmatprep.subr.bf16.mxu0 0
  %109 = vmatpush1.bf16.msra.mxu0 0
  %110 = vmatprep.subr.bf16.mxu0 0
  %111 = vmatpush1.bf16.msra.mxu0 0
  %112 = vmatprep.subr.bf16.mxu0 0
  %113 = vmatpush1.bf16.msra.mxu0 0
  %114 = vmatprep.subr.bf16.mxu0 0
  %115 = vmatpush1.bf16.msra.mxu0 0
  %116 = vmatprep.subr.bf16.mxu0 0
  %117 = vmatpush1.bf16.msra.mxu0 0
  %118 = vmatprep.subr.bf16.mxu0 0
  %119 = vmatpush1.bf16.msra.mxu0 0
  %120 = vmatprep.mubr.bf16.mxu0 0
  %121 = vmatmul.mubr.bf16.gmra.mrb[0].mxu0 %v73
  %v122 = vpop.f32.mrb[0].mxu0
  %v123 = vadd.f32 %v38, %v122
  %v124 = vpop.f32.mrb[0].mxu0
  %v125 = vadd.f32 %v42, %v124
  %v126 = vpop.f32.mrb[0].mxu0
  %v127 = vpop.f32.mrb[0].mxu0
  %128 = vdwg.mxu0
  %129 = vmatprep.subr.bf16.mxu0 %v86
  %130 = vmatpush1.bf16.msra.mxu0 %v83
  %131 = vmatprep.subr.bf16.mxu0 0
  %132 = vmatpush1.bf16.msra.mxu0 0
  %133 = vmatprep.subr.bf16.mxu0 0
  %134 = vmatpush1.bf16.msra.mxu0 0
  %135 = vmatprep.subr.bf16.mxu0 0
  %136 = vmatpush1.bf16.msra.mxu0 0
  %137 = vmatprep.subr.bf16.mxu0 0
  %138 = vmatpush1.bf16.msra.mxu0 0
  %139 = vmatprep.subr.bf16.mxu0 0
  %140 = vmatpush1.bf16.msra.mxu0 0
  %141 = vmatprep.subr.bf16.mxu0 0
  %142 = vmatpush1.bf16.msra.mxu0 0
  %143 = vmatprep.subr.bf16.mxu0 0
  %144 = vmatpush1.bf16.msra.mxu0 0
  %145 = vmatprep.subr.bf16.mxu0 0
  %146 = vmatpush1.bf16.msra.mxu0 0
  %147 = vmatprep.subr.bf16.mxu0 0
  %148 = vmatpush1.bf16.msra.mxu0 0
  %149 = vmatprep.subr.bf16.mxu0 0
  %150 = vmatpush1.bf16.msra.mxu0 0
  %151 = vmatprep.subr.bf16.mxu0 0
  %152 = vmatpush1.bf16.msra.mxu0 0
  %153 = vmatprep.subr.bf16.mxu0 0
  %154 = vmatpush1.bf16.msra.mxu0 0
  %155 = vmatprep.subr.bf16.mxu0 0
  %156 = vmatpush1.bf16.msra.mxu0 0
  %157 = vmatprep.subr.bf16.mxu0 0
  %158 = vmatpush1.bf16.msra.mxu0 0
  %159 = vmatprep.subr.bf16.mxu0 0
  %160 = vmatpush1.bf16.msra.mxu0 0
  %161 = vmatprep.mubr.bf16.mxu0 0
  %162 = vmatmul.mubr.bf16.gmra.mrb[0].mxu0 %v73
  %v163 = vpop.f32.mrb[0].mxu0
  %v164 = vadd.f32 %v46, %v163
  %v165 = vpop.f32.mrb[0].mxu0
  %v166 = vadd.f32 %v50, %v165
  %v167 = vpop.f32.mrb[0].mxu0
  %v168 = vpop.f32.mrb[0].mxu0
  %169 = vdwg.mxu0
  %v170 = vmax.f32 %v123, 0.0
  %v171 = vmax.f32 %v125, 0.0
  %v172 = vmax.f32 %v164, 0.0
  %v173 = vmax.f32 %v166, 0.0
  %v174 = vpack.c.bf16 %v170, %v170
  %v175 = vpack.c.bf16 %v171, %v171
  %v176 = vpack.c.bf16 %v172, %v172
  %v177 = vpack.c.bf16 %v173, %v173
  %v178 = vld [vmem:[%s3] sm:$0xff]
  %v179 = vld [vmem:[%s3 + $0x8] sm:$0xff]
  %v180 = vld [vmem:[%s3 + $0x10] sm:$0xff]
  %v181 = vld [vmem:[%s3 + $0x18] sm:$0xff]
  %v182 = vld [vmem:[%s3 + $0x20] sm:$0xff]
  %v183 = vld [vmem:[%s3 + $0x28] sm:$0xff]
  %v184 = vld [vmem:[%s3 + $0x30] sm:$0xff]
  %v185 = vld [vmem:[%s3 + $0x38] sm:$0xff]
  %v186 = vld [vmem:[%s3 + $0x40] sm:$0xff]
  %v187 = vld [vmem:[%s3 + $0x48] sm:$0xff]
  %v188 = vld [vmem:[%s3 + $0x50] sm:$0xff]
  %v189 = vld [vmem:[%s3 + $0x58] sm:$0xff]
  %v190 = vld [vmem:[%s3 + $0x60] sm:$0xff]
  %v191 = vld [vmem:[%s3 + $0x68] sm:$0xff]
  %v192 = vld [vmem:[%s3 + $0x70] sm:$0xff]
  %v193 = vld [vmem:[%s3 + $0x78] sm:$0xff]
  %v194 = vld [vmem:[%s3 + $0x80] sm:$0xff]
  %v195 = vld [vmem:[%s3 + $0x88] sm:$0xff]
  %v196 = vld [vmem:[%s3 + $0x90] sm:$0xff]
  %v197 = vld [vmem:[%s3 + $0x98] sm:$0xff]
  %v198 = vld [vmem:[%s3 + $0xa0] sm:$0xff]
  %v199 = vld [vmem:[%s3 + $0xa8] sm:$0xff]
  %v200 = vld [vmem:[%s3 + $0xb0] sm:$0xff]
  %v201 = vld [vmem:[%s3 + $0xb8] sm:$0xff]
  %v202 = vld [vmem:[%s3 + $0xc0] sm:$0xff]
  %v203 = vld [vmem:[%s3 + $0xc8] sm:$0xff]
  %v204 = vld [vmem:[%s3 + $0xd0] sm:$0xff]
  %v205 = vld [vmem:[%s3 + $0xd8] sm:$0xff]
  %v206 = vld [vmem:[%s3 + $0xe0] sm:$0xff]
  %v207 = vld [vmem:[%s3 + $0xe8] sm:$0xff]
  %v208 = vld [vmem:[%s3 + $0xf0] sm:$0xff]
  %v209 = vld [vmem:[%s3 + $0xf8] sm:$0xff]
  %v210 = vld [vmem:[%s3 + $0x100] sm:$0xff]
  %v211 = vld [vmem:[%s3 + $0x108] sm:$0xff]
  %v212 = vld [vmem:[%s3 + $0x110] sm:$0xff]
  %v213 = vld [vmem:[%s3 + $0x118] sm:$0xff]
  %v214 = vld [vmem:[%s3 + $0x120] sm:$0xff]
  %v215 = vld [vmem:[%s3 + $0x128] sm:$0xff]
  %v216 = vld [vmem:[%s3 + $0x130] sm:$0xff]
  %v217 = vld [vmem:[%s3 + $0x138] sm:$0xff]
  %v218 = vld [vmem:[%s3 + $0x140] sm:$0xff]
  %v219 = vld [vmem:[%s3 + $0x148] sm:$0xff]
  %v220 = vld [vmem:[%s3 + $0x150] sm:$0xff]
  %v221 = vld [vmem:[%s3 + $0x158] sm:$0xff]
  %v222 = vld [vmem:[%s3 + $0x160] sm:$0xff]
  %v223 = vld [vmem:[%s3 + $0x168] sm:$0xff]
  %v224 = vld [vmem:[%s3 + $0x170] sm:$0xff]
  %v225 = vld [vmem:[%s3 + $0x178] sm:$0xff]
  %v226 = vld [vmem:[%s3 + $0x180] sm:$0xff]
  %v227 = vld [vmem:[%s3 + $0x188] sm:$0xff]
  %v228 = vld [vmem:[%s3 + $0x190] sm:$0xff]
  %v229 = vld [vmem:[%s3 + $0x198] sm:$0xff]
  %v230 = vld [vmem:[%s3 + $0x1a0] sm:$0xff]
  %v231 = vld [vmem:[%s3 + $0x1a8] sm:$0xff]
  %v232 = vld [vmem:[%s3 + $0x1b0] sm:$0xff]
  %v233 = vld [vmem:[%s3 + $0x1b8] sm:$0xff]
  %v234 = vld [vmem:[%s3 + $0x1c0] sm:$0xff]
  %v235 = vld [vmem:[%s3 + $0x1c8] sm:$0xff]
  %v236 = vld [vmem:[%s3 + $0x1d0] sm:$0xff]
  %v237 = vld [vmem:[%s3 + $0x1d8] sm:$0xff]
  %v238 = vld [vmem:[%s3 + $0x1e0] sm:$0xff]
  %v239 = vld [vmem:[%s3 + $0x1e8] sm:$0xff]
  %v240 = vld [vmem:[%s3 + $0x1f0] sm:$0xff]
  %v241 = vld [vmem:[%s3 + $0x1f8] sm:$0xff]
  %v242 = vld [vmem:[%s4] sm:$0x3]
  %v244 = vlaneseq
  %v245 = vshrl.u32 %v244, 7
  %v246 = vsub.s32 0, %v245
  %v247 = vrot.slane %v242, %v246
  %v248 = vlaneseq
  %v249 = vshrl.u32 %v248, 7
  %v250 = vsub.s32 1, %v249
  %v251 = vrot.slane %v242, %v250
  %v318 = vunpack.c.l.b16 %v178
  %v319 = vunpack.c.h.b16 %v178
  %v320 = vunpack.c.l.b16 %v179
  %v321 = vunpack.c.h.b16 %v179
  %v322 = vunpack.c.l.b16 %v180
  %v323 = vunpack.c.h.b16 %v180
  %v324 = vunpack.c.l.b16 %v181
  %v325 = vunpack.c.h.b16 %v181
  %v326 = vunpack.c.l.b16 %v182
  %v327 = vunpack.c.h.b16 %v182
  %v328 = vunpack.c.l.b16 %v183
  %v329 = vunpack.c.h.b16 %v183
  %v330 = vunpack.c.l.b16 %v184
  %v331 = vunpack.c.h.b16 %v184
  %v332 = vunpack.c.l.b16 %v185
  %v333 = vunpack.c.h.b16 %v185
  %v334 = vunpack.c.l.b16 %v186
  %v335 = vunpack.c.h.b16 %v186
  %v336 = vunpack.c.l.b16 %v187
  %v337 = vunpack.c.h.b16 %v187
  %v338 = vunpack.c.l.b16 %v188
  %v339 = vunpack.c.h.b16 %v188
  %v340 = vunpack.c.l.b16 %v189
  %v341 = vunpack.c.h.b16 %v189
  %v342 = vunpack.c.l.b16 %v190
  %v343 = vunpack.c.h.b16 %v190
  %v344 = vunpack.c.l.b16 %v191
  %v345 = vunpack.c.h.b16 %v191
  %v346 = vunpack.c.l.b16 %v192
  %v347 = vunpack.c.h.b16 %v192
  %v348 = vunpack.c.l.b16 %v193
  %v349 = vunpack.c.h.b16 %v193
  %v350 = vunpack.c.l.b16 %v194
  %v351 = vunpack.c.h.b16 %v194
  %v352 = vunpack.c.l.b16 %v195
  %v353 = vunpack.c.h.b16 %v195
  %v354 = vunpack.c.l.b16 %v196
  %v355 = vunpack.c.h.b16 %v196
  %v356 = vunpack.c.l.b16 %v197
  %v357 = vunpack.c.h.b16 %v197
  %v358 = vunpack.c.l.b16 %v198
  %v359 = vunpack.c.h.b16 %v198
  %v360 = vunpack.c.l.b16 %v199
  %v361 = vunpack.c.h.b16 %v199
  %v362 = vunpack.c.l.b16 %v200
  %v363 = vunpack.c.h.b16 %v200
  %v364 = vunpack.c.l.b16 %v201
  %v365 = vunpack.c.h.b16 %v201
  %v366 = vunpack.c.l.b16 %v202
  %v367 = vunpack.c.h.b16 %v202
  %v368 = vunpack.c.l.b16 %v203
  %v369 = vunpack.c.h.b16 %v203
  %v370 = vunpack.c.l.b16 %v204
  %v371 = vunpack.c.h.b16 %v204
  %v372 = vunpack.c.l.b16 %v205
  %v373 = vunpack.c.h.b16 %v205
  %v374 = vunpack.c.l.b16 %v206
  %v375 = vunpack.c.h.b16 %v206
  %v376 = vunpack.c.l.b16 %v207
  %v377 = vunpack.c.h.b16 %v207
  %v378 = vunpack.c.l.b16 %v208
  %v379 = vunpack.c.h.b16 %v208
  %v380 = vunpack.c.l.b16 %v209
  %v381 = vunpack.c.h.b16 %v209
  %v382 = vunpack.c.l.b16 %v210
  %v383 = vunpack.c.h.b16 %v210
  %v384 = vunpack.c.l.b16 %v211
  %v385 = vunpack.c.h.b16 %v211
  %v386 = vunpack.c.l.b16 %v212
  %v387 = vunpack.c.h.b16 %v212
  %v388 = vunpack.c.l.b16 %v213
  %v389 = vunpack.c.h.b16 %v213
  %v390 = vunpack.c.l.b16 %v214
  %v391 = vunpack.c.h.b16 %v214
  %v392 = vunpack.c.l.b16 %v215
  %v393 = vunpack.c.h.b16 %v215
  %v394 = vunpack.c.l.b16 %v216
  %v395 = vunpack.c.h.b16 %v216
  %v396 = vunpack.c.l.b16 %v217
  %v397 = vunpack.c.h.b16 %v217
  %v398 = vunpack.c.l.b16 %v218
  %v399 = vunpack.c.h.b16 %v218
  %v400 = vunpack.c.l.b16 %v219
  %v401 = vunpack.c.h.b16 %v219
  %v402 = vunpack.c.l.b16 %v220
  %v403 = vunpack.c.h.b16 %v220
  %v404 = vunpack.c.l.b16 %v221
  %v405 = vunpack.c.h.b16 %v221
  %v406 = vunpack.c.l.b16 %v222
  %v407 = vunpack.c.h.b16 %v222
  %v408 = vunpack.c.l.b16 %v223
  %v409 = vunpack.c.h.b16 %v223
  %v410 = vunpack.c.l.b16 %v224
  %v411 = vunpack.c.h.b16 %v224
  %v412 = vunpack.c.l.b16 %v225
  %v413 = vunpack.c.h.b16 %v225
  %v414 = vunpack.c.l.b16 %v226
  %v415 = vunpack.c.h.b16 %v226
  %v416 = vunpack.c.l.b16 %v227
  %v417 = vunpack.c.h.b16 %v227
  %v418 = vunpack.c.l.b16 %v228
  %v419 = vunpack.c.h.b16 %v228
  %v420 = vunpack.c.l.b16 %v229
  %v421 = vunpack.c.h.b16 %v229
  %v422 = vunpack.c.l.b16 %v230
  %v423 = vunpack.c.h.b16 %v230
  %v424 = vunpack.c.l.b16 %v231
  %v425 = vunpack.c.h.b16 %v231
  %v426 = vunpack.c.l.b16 %v232
  %v427 = vunpack.c.h.b16 %v232
  %v428 = vunpack.c.l.b16 %v233
  %v429 = vunpack.c.h.b16 %v233
  %v430 = vunpack.c.l.b16 %v234
  %v431 = vunpack.c.h.b16 %v234
  %v432 = vunpack.c.l.b16 %v235
  %v433 = vunpack.c.h.b16 %v235
  %v434 = vunpack.c.l.b16 %v236
  %v435 = vunpack.c.h.b16 %v236
  %v436 = vunpack.c.l.b16 %v237
  %v437 = vunpack.c.h.b16 %v237
  %v438 = vunpack.c.l.b16 %v238
  %v439 = vunpack.c.h.b16 %v238
  %v440 = vunpack.c.l.b16 %v239
  %v441 = vunpack.c.h.b16 %v239
  %v442 = vunpack.c.l.b16 %v240
  %v443 = vunpack.c.h.b16 %v240
  %v444 = vunpack.c.l.b16 %v241
  %v445 = vunpack.c.h.b16 %v241
  %v446 = vpack.c.b16 %v320, %v318
  %v447 = vpack.c.b16 %v321, %v319
  %v448 = vpack.c.b16 %v324, %v322
  %v449 = vpack.c.b16 %v325, %v323
  %v450 = vpack.c.b16 %v328, %v326
  %v451 = vpack.c.b16 %v329, %v327
  %v452 = vpack.c.b16 %v332, %v330
  %v453 = vpack.c.b16 %v333, %v331
  %v454 = vpack.c.b16 %v336, %v334
  %v455 = vpack.c.b16 %v337, %v335
  %v456 = vpack.c.b16 %v340, %v338
  %v457 = vpack.c.b16 %v341, %v339
  %v458 = vpack.c.b16 %v344, %v342
  %v459 = vpack.c.b16 %v345, %v343
  %v460 = vpack.c.b16 %v348, %v346
  %v461 = vpack.c.b16 %v349, %v347
  %v462 = vpack.c.b16 %v352, %v350
  %v463 = vpack.c.b16 %v353, %v351
  %v464 = vpack.c.b16 %v356, %v354
  %v465 = vpack.c.b16 %v357, %v355
  %v466 = vpack.c.b16 %v360, %v358
  %v467 = vpack.c.b16 %v361, %v359
  %v468 = vpack.c.b16 %v364, %v362
  %v469 = vpack.c.b16 %v365, %v363
  %v470 = vpack.c.b16 %v368, %v366
  %v471 = vpack.c.b16 %v369, %v367
  %v472 = vpack.c.b16 %v372, %v370
  %v473 = vpack.c.b16 %v373, %v371
  %v474 = vpack.c.b16 %v376, %v374
  %v475 = vpack.c.b16 %v377, %v375
  %v476 = vpack.c.b16 %v380, %v378
  %v477 = vpack.c.b16 %v381, %v379
  %v478 = vpack.c.b16 %v384, %v382
  %v479 = vpack.c.b16 %v385, %v383
  %v480 = vpack.c.b16 %v388, %v386
  %v481 = vpack.c.b16 %v389, %v387
  %v482 = vpack.c.b16 %v392, %v390
  %v483 = vpack.c.b16 %v393, %v391
  %v484 = vpack.c.b16 %v396, %v394
  %v485 = vpack.c.b16 %v397, %v395
  %v486 = vpack.c.b16 %v400, %v398
  %v487 = vpack.c.b16 %v401, %v399
  %v488 = vpack.c.b16 %v404, %v402
  %v489 = vpack.c.b16 %v405, %v403
  %v490 = vpack.c.b16 %v408, %v406
  %v491 = vpack.c.b16 %v409, %v407
  %v492 = vpack.c.b16 %v412, %v410
  %v493 = vpack.c.b16 %v413, %v411
  %v494 = vpack.c.b16 %v416, %v414
  %v495 = vpack.c.b16 %v417, %v415
  %v496 = vpack.c.b16 %v420, %v418
  %v497 = vpack.c.b16 %v421, %v419
  %v498 = vpack.c.b16 %v424, %v422
  %v499 = vpack.c.b16 %v425, %v423
  %v500 = vpack.c.b16 %v428, %v426
  %v501 = vpack.c.b16 %v429, %v427
  %v502 = vpack.c.b16 %v432, %v430
  %v503 = vpack.c.b16 %v433, %v431
  %v504 = vpack.c.b16 %v436, %v434
  %v505 = vpack.c.b16 %v437, %v435
  %v506 = vpack.c.b16 %v440, %v438
  %v507 = vpack.c.b16 %v441, %v439
  %v508 = vpack.c.b16 %v444, %v442
  %v509 = vpack.c.b16 %v445, %v443
  %574 = vmatprep.subr.bf16.mxu0 %v447
  %575 = vmatpush1.bf16.msra.mxu0 %v446
  %576 = vmatprep.subr.bf16.mxu0 %v449
  %577 = vmatpush1.bf16.msra.mxu0 %v448
  %578 = vmatprep.subr.bf16.mxu0 %v451
  %579 = vmatpush1.bf16.msra.mxu0 %v450
  %580 = vmatprep.subr.bf16.mxu0 %v453
  %581 = vmatpush1.bf16.msra.mxu0 %v452
  %582 = vmatprep.subr.bf16.mxu0 %v455
  %583 = vmatpush1.bf16.msra.mxu0 %v454
  %584 = vmatprep.subr.bf16.mxu0 %v457
  %585 = vmatpush1.bf16.msra.mxu0 %v456
  %586 = vmatprep.subr.bf16.mxu0 %v459
  %587 = vmatpush1.bf16.msra.mxu0 %v458
  %588 = vmatprep.subr.bf16.mxu0 %v461
  %589 = vmatpush1.bf16.msra.mxu0 %v460
  %590 = vmatprep.subr.bf16.mxu0 %v463
  %591 = vmatpush1.bf16.msra.mxu0 %v462
  %592 = vmatprep.subr.bf16.mxu0 %v465
  %593 = vmatpush1.bf16.msra.mxu0 %v464
  %594 = vmatprep.subr.bf16.mxu0 %v467
  %595 = vmatpush1.bf16.msra.mxu0 %v466
  %596 = vmatprep.subr.bf16.mxu0 %v469
  %597 = vmatpush1.bf16.msra.mxu0 %v468
  %598 = vmatprep.subr.bf16.mxu0 %v471
  %599 = vmatpush1.bf16.msra.mxu0 %v470
  %600 = vmatprep.subr.bf16.mxu0 %v473
  %601 = vmatpush1.bf16.msra.mxu0 %v472
  %602 = vmatprep.subr.bf16.mxu0 %v475
  %603 = vmatpush1.bf16.msra.mxu0 %v474
  %604 = vmatprep.subr.bf16.mxu0 %v477
  %605 = vmatpush1.bf16.msra.mxu0 %v476
  %606 = vmatprep.mubr.bf16.mxu0 %v175
  %607 = vmatmul.mubr.bf16.gmra.mrb[0].mxu0 %v174
  %v608 = vpop.f32.mrb[0].mxu0
  %v609 = vadd.f32 %v247, %v608
  %v610 = vpop.f32.mrb[0].mxu0
  %v611 = vadd.f32 %v251, %v610
  %v612 = vpop.f32.mrb[0].mxu0
  %v613 = vpop.f32.mrb[0].mxu0
  %614 = vdwg.mxu0
  %615 = vmatprep.subr.bf16.mxu0 %v479
  %616 = vmatpush1.bf16.msra.mxu0 %v478
  %617 = vmatprep.subr.bf16.mxu0 %v481
  %618 = vmatpush1.bf16.msra.mxu0 %v480
  %619 = vmatprep.subr.bf16.mxu0 %v483
  %620 = vmatpush1.bf16.msra.mxu0 %v482
  %621 = vmatprep.subr.bf16.mxu0 %v485
  %622 = vmatpush1.bf16.msra.mxu0 %v484
  %623 = vmatprep.subr.bf16.mxu0 %v487
  %624 = vmatpush1.bf16.msra.mxu0 %v486
  %625 = vmatprep.subr.bf16.mxu0 %v489
  %626 = vmatpush1.bf16.msra.mxu0 %v488
  %627 = vmatprep.subr.bf16.mxu0 %v491
  %628 = vmatpush1.bf16.msra.mxu0 %v490
  %629 = vmatprep.subr.bf16.mxu0 %v493
  %630 = vmatpush1.bf16.msra.mxu0 %v492
  %631 = vmatprep.subr.bf16.mxu0 %v495
  %632 = vmatpush1.bf16.msra.mxu0 %v494
  %633 = vmatprep.subr.bf16.mxu0 %v497
  %634 = vmatpush1.bf16.msra.mxu0 %v496
  %635 = vmatprep.subr.bf16.mxu0 %v499
  %636 = vmatpush1.bf16.msra.mxu0 %v498
  %637 = vmatprep.subr.bf16.mxu0 %v501
  %638 = vmatpush1.bf16.msra.mxu0 %v500
  %639 = vmatprep.subr.bf16.mxu0 %v503
  %640 = vmatpush1.bf16.msra.mxu0 %v502
  %641 = vmatprep.subr.bf16.mxu0 %v505
  %642 = vmatpush1.bf16.msra.mxu0 %v504
  %643 = vmatprep.subr.bf16.mxu0 %v507
  %644 = vmatpush1.bf16.msra.mxu0 %v506
  %645 = vmatprep.subr.bf16.mxu0 %v509
  %646 = vmatpush1.bf16.msra.mxu0 %v508
  %647 = vmatprep.mubr.bf16.mxu0 %v177
  %648 = vmatmul.mubr.bf16.gmra.mrb[0].mxu0 %v176
  %v649 = vpop.f32.mrb[0].mxu0
  %v650 = vadd.f32 %v609, %v649
  %v651 = vpop.f32.mrb[0].mxu0
  %v652 = vadd.f32 %v611, %v651
  %v653 = vpop.f32.mrb[0].mxu0
  %v654 = vpop.f32.mrb[0].mxu0
  %655 = vdwg.mxu0
  %v656 = vmax.f32 %v650, 0.0
  %v657 = vmax.f32 %v652, 0.0
  %v658 = vpack.c.bf16 %v656, %v656
  %v659 = vpack.c.bf16 %v657, %v657
  %v660 = vld [vmem:[%s5] sm:$0xf]
  %v661 = vld [vmem:[%s5 + $0x4] sm:$0xf]
  %v662 = vld [vmem:[%s5 + $0x8] sm:$0xf]
  %v663 = vld [vmem:[%s5 + $0xc] sm:$0xf]
  %v664 = vld [vmem:[%s5 + $0x10] sm:$0xf]
  %v665 = vld [vmem:[%s5 + $0x14] sm:$0xf]
  %v666 = vld [vmem:[%s5 + $0x18] sm:$0xf]
  %v667 = vld [vmem:[%s5 + $0x1c] sm:$0xf]
  %v668 = vld [vmem:[%s5 + $0x20] sm:$0xf]
  %v669 = vld [vmem:[%s5 + $0x24] sm:$0xf]
  %v670 = vld [vmem:[%s5 + $0x28] sm:$0xf]
  %v671 = vld [vmem:[%s5 + $0x2c] sm:$0xf]
  %v672 = vld [vmem:[%s5 + $0x30] sm:$0xf]
  %v673 = vld [vmem:[%s5 + $0x34] sm:$0xf]
  %v674 = vld [vmem:[%s5 + $0x38] sm:$0xf]
  %v675 = vld [vmem:[%s5 + $0x3c] sm:$0xf]
  %v676 = vld [vmem:[%s5 + $0x40] sm:$0xf]
  %v677 = vld [vmem:[%s5 + $0x44] sm:$0xf]
  %v678 = vld [vmem:[%s5 + $0x48] sm:$0xf]
  %v679 = vld [vmem:[%s5 + $0x4c] sm:$0xf]
  %v680 = vld [vmem:[%s5 + $0x50] sm:$0xf]
  %v681 = vld [vmem:[%s5 + $0x54] sm:$0xf]
  %v682 = vld [vmem:[%s5 + $0x58] sm:$0xf]
  %v683 = vld [vmem:[%s5 + $0x5c] sm:$0xf]
  %v684 = vld [vmem:[%s5 + $0x60] sm:$0xf]
  %v685 = vld [vmem:[%s5 + $0x64] sm:$0xf]
  %v686 = vld [vmem:[%s5 + $0x68] sm:$0xf]
  %v687 = vld [vmem:[%s5 + $0x6c] sm:$0xf]
  %v688 = vld [vmem:[%s5 + $0x70] sm:$0xf]
  %v689 = vld [vmem:[%s5 + $0x74] sm:$0xf]
  %v690 = vld [vmem:[%s5 + $0x78] sm:$0xf]
  %v691 = vld [vmem:[%s5 + $0x7c] sm:$0xf]
  %v692 = vld [vmem:[%s6] sm:$0x1]
  %v694 = vlaneseq
  %v695 = vshrl.u32 %v694, 7
  %v696 = vsub.s32 0, %v695
  %v697 = vrot.slane %v692, %v696
  %v731 = vunpack.c.l.b16 %v660
  %v732 = vunpack.c.l.b16 %v661
  %v733 = vunpack.c.l.b16 %v662
  %v734 = vunpack.c.l.b16 %v663
  %v735 = vunpack.c.l.b16 %v664
  %v736 = vunpack.c.l.b16 %v665
  %v737 = vunpack.c.l.b16 %v666
  %v738 = vunpack.c.l.b16 %v667
  %v739 = vunpack.c.l.b16 %v668
  %v740 = vunpack.c.l.b16 %v669
  %v741 = vunpack.c.l.b16 %v670
  %v742 = vunpack.c.l.b16 %v671
  %v743 = vunpack.c.l.b16 %v672
  %v744 = vunpack.c.l.b16 %v673
  %v745 = vunpack.c.l.b16 %v674
  %v746 = vunpack.c.l.b16 %v675
  %v747 = vunpack.c.l.b16 %v676
  %v748 = vunpack.c.l.b16 %v677
  %v749 = vunpack.c.l.b16 %v678
  %v750 = vunpack.c.l.b16 %v679
  %v751 = vunpack.c.l.b16 %v680
  %v752 = vunpack.c.l.b16 %v681
  %v753 = vunpack.c.l.b16 %v682
  %v754 = vunpack.c.l.b16 %v683
  %v755 = vunpack.c.l.b16 %v684
  %v756 = vunpack.c.l.b16 %v685
  %v757 = vunpack.c.l.b16 %v686
  %v758 = vunpack.c.l.b16 %v687
  %v759 = vunpack.c.l.b16 %v688
  %v760 = vunpack.c.l.b16 %v689
  %v761 = vunpack.c.l.b16 %v690
  %v762 = vunpack.c.l.b16 %v691
  %v763 = vpack.c.b16 %v732, %v731
  %v764 = vpack.c.b16 %v734, %v733
  %v765 = vpack.c.b16 %v736, %v735
  %v766 = vpack.c.b16 %v738, %v737
  %v767 = vpack.c.b16 %v740, %v739
  %v768 = vpack.c.b16 %v742, %v741
  %v769 = vpack.c.b16 %v744, %v743
  %v770 = vpack.c.b16 %v746, %v745
  %v771 = vpack.c.b16 %v748, %v747
  %v772 = vpack.c.b16 %v750, %v749
  %v773 = vpack.c.b16 %v752, %v751
  %v774 = vpack.c.b16 %v754, %v753
  %v775 = vpack.c.b16 %v756, %v755
  %v776 = vpack.c.b16 %v758, %v757
  %v777 = vpack.c.b16 %v760, %v759
  %v778 = vpack.c.b16 %v762, %v761
  %795 = vmatprep.subr.bf16.mxu0 0
  %796 = vmatpush1.bf16.msra.mxu0 %v763
  %797 = vmatprep.subr.bf16.mxu0 0
  %798 = vmatpush1.bf16.msra.mxu0 %v764
  %799 = vmatprep.subr.bf16.mxu0 0
  %800 = vmatpush1.bf16.msra.mxu0 %v765
  %801 = vmatprep.subr.bf16.mxu0 0
  %802 = vmatpush1.bf16.msra.mxu0 %v766
  %803 = vmatprep.subr.bf16.mxu0 0
  %804 = vmatpush1.bf16.msra.mxu0 %v767
  %805 = vmatprep.subr.bf16.mxu0 0
  %806 = vmatpush1.bf16.msra.mxu0 %v768
  %807 = vmatprep.subr.bf16.mxu0 0
  %808 = vmatpush1.bf16.msra.mxu0 %v769
  %809 = vmatprep.subr.bf16.mxu0 0
  %810 = vmatpush1.bf16.msra.mxu0 %v770
  %811 = vmatprep.subr.bf16.mxu0 0
  %812 = vmatpush1.bf16.msra.mxu0 %v771
  %813 = vmatprep.subr.bf16.mxu0 0
  %814 = vmatpush1.bf16.msra.mxu0 %v772
  %815 = vmatprep.subr.bf16.mxu0 0
  %816 = vmatpush1.bf16.msra.mxu0 %v773
  %817 = vmatprep.subr.bf16.mxu0 0
  %818 = vmatpush1.bf16.msra.mxu0 %v774
  %819 = vmatprep.subr.bf16.mxu0 0
  %820 = vmatpush1.bf16.msra.mxu0 %v775
  %821 = vmatprep.subr.bf16.mxu0 0
  %822 = vmatpush1.bf16.msra.mxu0 %v776
  %823 = vmatprep.subr.bf16.mxu0 0
  %824 = vmatpush1.bf16.msra.mxu0 %v777
  %825 = vmatprep.subr.bf16.mxu0 0
  %826 = vmatpush1.bf16.msra.mxu0 %v778
  %827 = vmatprep.mubr.bf16.mxu0 %v659
  %828 = vmatmul.mubr.bf16.gmra.mrb[0].mxu0 %v658
  %v829 = vpop.f32.mrb[0].mxu0
  %v830 = vadd.f32 %v697, %v829
  %v831 = vpop.f32.mrb[0].mxu0
  %v832 = vpop.f32.mrb[0].mxu0
  %v833 = vpop.f32.mrb[0].mxu0
  %834 = vdwg.mxu0
  %v835 = vxor.u32 %v830, 2147483648
  %v836 = vmul.f32 %v835, 1.442695
  %v837 = vpow.pop %v836
  %v838 = vadd.f32 %v837, 1.0
  %v839 = vrcp.pop %v838
  %v840 = vmul.f32 1.0, %v839
  %841 = vst [vmem:[%s7] sm:$0xff] %v840
  // Predicated region
  $region30: #{word_confidence_linear_head.1} parent=0 // pred_check
    _
  $region31: #{word_confidence_linear_head.1} parent=0 // pred_check_branch
    %843 = sbr.rel (0) target = $region33
  $region32: #{word_confidence_linear_head.1} parent=0 // pred_region
    _
  $region33: #{word_confidence_linear_head.1} parent=0 // pred_fallthru
    _
  // Predicated region
  $region34: #{word_confidence_linear_head.1} parent=0 // pred_check
    _
  $region35: #{word_confidence_linear_head.1} parent=0 // pred_check_branch
    %845 = sbr.rel (0) target = $region37
  $region36: #{word_confidence_linear_head.1} parent=0 // pred_region
    _
  $region37: #{word_confidence_linear_head.1} parent=0 // pred_fallthru
    _

</llo_original>
